<compile_context>
chip_gen: v5e
topology: v5e:2x2
jax: 0.10.0
libtpu: 0.0.40
codegen_flags: <defaults>
</compile_context>

<pallas_src>
import jax
import jax.numpy as jnp
from jax.experimental import pallas as pl
from jax.experimental.pallas import tpu as pltpu

_MiB = 1024 * 1024


def _round_up(x, m):
    return (x + m - 1) // m * m


def _chip_info():
    """Return (vmem_capacity_bytes, is_v5) with conservative fallbacks."""
    kind = ""
    try:
        kind = jax.devices()[0].device_kind.lower()
    except Exception:
        pass
    is_v5 = "v5" in kind
    vmem_cap = 64 * _MiB          # safe floor on every generation (v7x = 64 MiB)
    try:
        vmem_cap = int(pltpu.get_tpu_info().vmem_capacity_bytes)
    except Exception:
        if is_v5 or "v6" in kind:
            vmem_cap = 128 * _MiB
    return vmem_cap, is_v5


def _choose_tk(d_ff, target, align):
    """d_ff reduction tile: aligned divisor of d_ff if possible, else pad d_ff.
    Returns (tk, d_ff_padded)."""
    target = max(align, (min(target, _round_up(d_ff, align)) // align) * align)
    if d_ff <= target:
        return d_ff, d_ff                          # single k step, no padding
    best_tk, best_pad = align, _round_up(d_ff, align)
    for tk in range(target, align - 1, -align):
        pad = _round_up(d_ff, tk)
        if pad - d_ff <= max(d_ff // 16, 0):       # <= ~6% padding overhead
            return tk, pad
        if pad < best_pad:
            best_tk, best_pad = tk, pad
    return best_tk, best_pad


def _make_ffn_kernel(use_scratch, cast_dtype, epilogue_dtype):
    def kernel(x_ref, w1_ref, b1_ref, w2_ref, b2_ref, o_ref, *scratch):
        # x_ref:   (tm, d_model)    input row tile (resident across k)
        # w1_ref:  (d_model, tk)    W1 slab for this d_ff chunk
        # b1_ref:  (1, tk)          epilogue-dtype bias slab
        # w2_ref:  (tk, d_model)    W2 slab for this d_ff chunk
        # b2_ref:  (1, d_model)     f32
        # o_ref:   (tm, d_model)    output tile (resident across k)
        # scratch: optional f32 accumulator (only when output dtype != f32)
        acc_ref = scratch[0] if use_scratch else o_ref
        k = pl.program_id(1)

        @pl.when(k == 0)
        def _():
            acc_ref[...] = jnp.zeros_like(acc_ref)

        x = x_ref[...]
        if cast_dtype is not None and x.dtype != jnp.dtype(cast_dtype):
            x = x.astype(cast_dtype)       # in-kernel cast: x read from HBM once
        # First GEMM: f32 accumulation on the MXU.
        h = jnp.dot(x, w1_ref[...], preferred_element_type=jnp.float32)
        # Bias + ReLU epilogue (bf16 on chips with a bf16 VPU, f32 otherwise).
        h = h.astype(epilogue_dtype)
        h = jnp.maximum(h + b1_ref[...], 0.0)
        # dropout: identity (eval mode)
        # Second GEMM: partial product for this d_ff chunk, accumulate in f32.
        acc_ref[...] += jnp.dot(h.astype(w2_ref.dtype), w2_ref[...],
                                preferred_element_type=jnp.float32)

        @pl.when(k == pl.num_programs(1) - 1)
        def _():
            o_ref[...] = (acc_ref[...] + b2_ref[...]).astype(o_ref.dtype)

    return kernel


def feed_forward_block(x, w1, b1, w2, b2, *, tm=None, tk_ff=2048,
                       compute_dtype=None):
    """Fused y = relu(x @ w1 + b1) @ w2 + b2   (dropout = identity, eval mode).

    x: (batch, seq, d_model); w1: (d_model, d_ff); b1: (d_ff,);
    w2: (d_ff, d_model); b2: (d_model,).
    compute_dtype: optional matmul-input dtype (e.g. jnp.bfloat16); MXU
    accumulation stays f32, output keeps x's dtype."""
    batch, seq, d_model = x.shape
    d_ff = w1.shape[1]
    out_dtype = x.dtype
    n_rows = batch * seq

    vmem_cap, is_v5 = _chip_info()
    lane_align = 128 if is_v5 else 256     # d_ff-tile alignment (MXU width)
    sublane_min = 8                        # x kept in its (>= 4B) HBM dtype

    # ---- dtypes -----------------------------------------------------------
    if compute_dtype is not None:
        w1 = w1.astype(compute_dtype)      # weights cast once in the wrapper:
        w2 = w2.astype(compute_dtype)      # they are re-streamed per row tile
    w_dtype = w1.dtype
    if (compute_dtype is not None and not is_v5
            and jnp.dtype(compute_dtype) == jnp.dtype(jnp.bfloat16)):
        epilogue_dtype = jnp.bfloat16      # bf16 bias+ReLU on v6e/v7x
    else:
        epilogue_dtype = jnp.float32       # f32 epilogue on v5e / f32 path
    b1_2d = b1.astype(epilogue_dtype).reshape(1, d_ff)
    b2_2d = b2.astype(jnp.float32).reshape(1, d_model)
    use_scratch = jnp.dtype(out_dtype) != jnp.dtype(jnp.float32)

    # ---- row tiling ---------------------------------------------------------
    rows_aligned = _round_up(n_rows, sublane_min)
    if tm is None:
        tm = 512 if n_rows >= 2048 else 256
    tm_eff = min(tm, rows_aligned)
    # Feed both v7x TensorCores: ensure the parallel row axis has >= 2 steps.
    if _round_up(n_rows, tm_eff) // tm_eff == 1 and tm_eff >= 2 * sublane_min:
        tm_eff = _round_up((tm_eff + 1) // 2, sublane_min)

    # ---- VMEM budget + d_ff reduction tiling --------------------------------
    headroom = 16 * _MiB if vmem_cap <= 96 * _MiB else 24 * _MiB
    budget = vmem_cap - headroom
    itemsz = lambda dt: jnp.dtype(dt).itemsize

    def vmem_needed(tm_, tk_):
        slabs = (d_model * tk_ + tk_ * d_model) * itemsz(w_dtype) \
                + tk_ * itemsz(epilogue_dtype)
        fixed = tm_ * d_model * (itemsz(x.dtype) + itemsz(out_dtype)) \
                + d_model * 4
        acc = tm_ * d_model * 4 if use_scratch else 0
        h_tmp = tm_ * tk_ * (4 + itemsz(epilogue_dtype))   # spilled h tile
        return 2 * (slabs + fixed) + acc + h_tmp

    tk_target = tk_ff
    while True:
        tk_eff, d_ff_pad = _choose_tk(d_ff, tk_target, lane_align)
        if vmem_needed(tm_eff, tk_eff) <= budget:
            break
        if tk_target > lane_align:
            tk_target = max(lane_align, tk_target // 2)
        elif tm_eff > sublane_min:
            tm_eff = max(sublane_min, _round_up(tm_eff // 2, sublane_min))
        else:
            break                                  # cannot shrink further

    # ---- pad inputs ----------------------------------------------------------
    n_pad = _round_up(n_rows, tm_eff)
    x2d = x.reshape(n_rows, d_model)
    if n_pad != n_rows:
        x2d = jnp.pad(x2d, ((0, n_pad - n_rows), (0, 0)))
    if d_ff_pad != d_ff:
        w1 = jnp.pad(w1, ((0, 0), (0, d_ff_pad - d_ff)))
        w2 = jnp.pad(w2, ((0, d_ff_pad - d_ff), (0, 0)))
        b1_2d = jnp.pad(b1_2d, ((0, 0), (0, d_ff_pad - d_ff)))

    grid = (n_pad // tm_eff, d_ff_pad // tk_eff)
    n_row_tiles = grid[0]

    needed = vmem_needed(tm_eff, tk_eff)
    vmem_limit = int(min(vmem_cap - 4 * _MiB,
                         max(int(1.25 * needed), 32 * _MiB)))

    cost = pl.CostEstimate(
        flops=4 * n_pad * d_model * d_ff_pad,
        transcendentals=0,
        bytes_accessed=int(
            x2d.size * itemsz(x2d.dtype)
            + n_row_tiles * ((w1.size + w2.size) * itemsz(w_dtype)
                             + b1_2d.size * itemsz(b1_2d.dtype))
            + b2_2d.size * 4
            + n_pad * d_model * itemsz(out_dtype)),
    )

    scratch = ((pltpu.VMEM((tm_eff, d_model), jnp.float32),)
               if use_scratch else ())
    kernel = _make_ffn_kernel(use_scratch, compute_dtype, epilogue_dtype)

    out2d = pl.pallas_call(
        kernel,
        out_shape=jax.ShapeDtypeStruct((n_pad, d_model), out_dtype),
        grid_spec=pltpu.PrefetchScalarGridSpec(
            num_scalar_prefetch=0,
            grid=grid,
            in_specs=[
                pl.BlockSpec((tm_eff, d_model), lambda i, k: (i, 0)),   # x rows
                pl.BlockSpec((d_model, tk_eff), lambda i, k: (0, k)),   # W1 slab
                pl.BlockSpec((1, tk_eff), lambda i, k: (0, k)),         # b1 slab
                pl.BlockSpec((tk_eff, d_model), lambda i, k: (k, 0)),   # W2 slab
                pl.BlockSpec((1, d_model), lambda i, k: (0, 0)),        # b2
            ],
            out_specs=pl.BlockSpec((tm_eff, d_model), lambda i, k: (i, 0)),
            scratch_shapes=scratch,
        ),
        compiler_params=pltpu.CompilerParams(
            dimension_semantics=("parallel", "arbitrary"),
            vmem_limit_bytes=vmem_limit,
        ),
        cost_estimate=cost,
    )(x2d, w1, b1_2d, w2, b2_2d)

    if n_pad != n_rows:
        out2d = out2d[:n_rows]
    return out2d.reshape(batch, seq, d_model)


def _init_params(key, d_model, d_ff, dtype=jnp.float32):
    """Deterministic init mimicking nn.Linear's U(-1/sqrt(fan_in), 1/sqrt(fan_in)).
    Weights stored transposed relative to PyTorch: (in, out)."""
    k1, k2, k3, k4 = jax.random.split(key, 4)
    bound1 = 1.0 / (d_model ** 0.5)
    bound2 = 1.0 / (d_ff ** 0.5)
    w1 = jax.random.uniform(k1, (d_model, d_ff), dtype, -bound1, bound1)
    b1 = jax.random.uniform(k2, (d_ff,), dtype, -bound1, bound1)
    w2 = jax.random.uniform(k3, (d_ff, d_model), dtype, -bound2, bound2)
    b2 = jax.random.uniform(k4, (d_model,), dtype, -bound2, bound2)
    return w1, b1, w2, b2


if __name__ == "__main__":
    key = jax.random.PRNGKey(0)
    kx, kp, kx2, kp2 = jax.random.split(key, 4)

    # --- f32 path at the small shapes implied by the module -----------------
    batch, seq, d_model, d_ff = 2, 8, 32, 64
    x = jax.random.normal(kx, (batch, seq, d_model), jnp.float32)
    w1, b1, w2, b2 = _init_params(kp, d_model, d_ff)

    out = feed_forward_block(x, w1, b1, w2, b2)
    out = jax.block_until_ready(out)
    ref = jnp.maximum(x @ w1 + b1, 0.0) @ w2 + b2
    assert out.shape == (batch, seq, d_model)
    assert jnp.allclose(out, ref, atol=1e-5, rtol=1e-5)

    # --- bf16 weight-streaming path at lane-dense shapes ---------------------
    batch2, seq2, d_model2, d_ff2 = 2, 8, 128, 256
    x2 = jax.random.normal(kx2, (batch2, seq2, d_model2), jnp.float32)
    w1b, b1b, w2b, b2b = _init_params(kp2, d_model2, d_ff2)

    out_bf16 = feed_forward_block(x2, w1b, b1b, w2b, b2b,
                                  compute_dtype=jnp.bfloat16)
    out_bf16 = jax.block_until_ready(out_bf16)
    ref2 = jnp.maximum(x2 @ w1b + b1b, 0.0) @ w2b + b2b
    assert out_bf16.shape == (batch2, seq2, d_model2)
    assert jnp.allclose(out_bf16.astype(jnp.float32), ref2,
                        atol=5e-2, rtol=5e-2)

    print("KERNEL_OK")
</pallas_src>

<mosaic_0001>
module attributes {stable_mosaic.version = 11 : i64} {
  func.func @kernel(%arg0: i32, %arg1: i32, %arg2: memref<8x32xf32, #tpu.memory_space<vmem>>, %arg3: memref<32x64xf32, #tpu.memory_space<vmem>>, %arg4: memref<1x64xf32, #tpu.memory_space<vmem>>, %arg5: memref<64x32xf32, #tpu.memory_space<vmem>>, %arg6: memref<1x32xf32, #tpu.memory_space<vmem>>, %arg7: memref<8x32xf32, #tpu.memory_space<vmem>>) attributes {dimension_semantics = [#tpu.dimension_semantics<parallel>, #tpu.dimension_semantics<arbitrary>], iteration_bounds = array<i64: 2, 1>, scalar_prefetch = 0 : i64, scratch_operands = 0 : i64, tpu.core_type = #tpu.core_type<tc>, window_params = [{transform_indices = @transform_0, window_bounds = array<i64: 8, 32>}, {transform_indices = @transform_1, window_bounds = array<i64: 32, 64>}, {transform_indices = @transform_2, window_bounds = array<i64: 1, 64>}, {transform_indices = @transform_3, window_bounds = array<i64: 64, 32>}, {pipeline_mode = #tpu.pipeline_mode<synchronous>, transform_indices = @transform_4, window_bounds = array<i64: 1, 32>}, {transform_indices = @transform_5, window_bounds = array<i64: 8, 32>}]} {
    %c0_i32 = arith.constant 0 : i32
    %0 = arith.cmpi eq, %arg1, %c0_i32 : i32
    %1 = arith.extui %0 : i1 to i32
    %c0_i32_0 = arith.constant 0 : i32
    %2 = arith.cmpi ne, %1, %c0_i32_0 : i32
    scf.if %2 {
      %cst_16 = arith.constant 0.000000e+00 : f32
      %19 = vector.broadcast %cst_16 : f32 to vector<8x32xf32>
      %c0_17 = arith.constant 0 : index
      %c0_18 = arith.constant 0 : index
      %20 = vector.load %arg7[%c0_17, %c0_18] : memref<8x32xf32, #tpu.memory_space<vmem>>, vector<8x32xf32>
      tpu.vector_store %arg7[%c0_17, %c0_18], %19 {strides = array<i32>} : memref<8x32xf32, #tpu.memory_space<vmem>>, vector<8x32xf32>,
    } else {
    }
    %c0 = arith.constant 0 : index
    %c0_1 = arith.constant 0 : index
    %3 = vector.load %arg2[%c0, %c0_1] : memref<8x32xf32, #tpu.memory_space<vmem>>, vector<8x32xf32>
    %c0_2 = arith.constant 0 : index
    %c0_3 = arith.constant 0 : index
    %4 = vector.load %arg3[%c0_2, %c0_3] : memref<32x64xf32, #tpu.memory_space<vmem>>, vector<32x64xf32>
    %cst = arith.constant dense<0.000000e+00> : vector<8x64xf32>
    %5 = tpu.matmul %3, %4, %cst {dimension_numbers = #tpu.dot_dimension_numbers<[1], [0], [0], [1], [0, 0, 1, 1], [], []>} : vector<8x32xf32>, vector<32x64xf32>, vector<8x64xf32> -> vector<8x64xf32>
    %c0_4 = arith.constant 0 : index
    %c0_5 = arith.constant 0 : index
    %6 = vector.load %arg4[%c0_4, %c0_5] : memref<1x64xf32, #tpu.memory_space<vmem>>, vector<1x64xf32>
    %7 = vector.broadcast %6 : vector<1x64xf32> to vector<8x64xf32>
    %8 = arith.addf %5, %7 : vector<8x64xf32>
    %cst_6 = arith.constant 0.000000e+00 : f32
    %9 = vector.broadcast %cst_6 : f32 to vector<8x64xf32>
    %10 = arith.maximumf %8, %9 : vector<8x64xf32>
    %c0_7 = arith.constant 0 : index
    %c0_8 = arith.constant 0 : index
    %11 = vector.load %arg7[%c0_7, %c0_8] : memref<8x32xf32, #tpu.memory_space<vmem>>, vector<8x32xf32>
    %c0_9 = arith.constant 0 : index
    %c0_10 = arith.constant 0 : index
    %12 = vector.load %arg5[%c0_9, %c0_10] : memref<64x32xf32, #tpu.memory_space<vmem>>, vector<64x32xf32>
    %cst_11 = arith.constant dense<0.000000e+00> : vector<8x32xf32>
    %13 = tpu.matmul %10, %12, %cst_11 {dimension_numbers = #tpu.dot_dimension_numbers<[1], [0], [0], [1], [0, 0, 1, 1], [], []>} : vector<8x64xf32>, vector<64x32xf32>, vector<8x32xf32> -> vector<8x32xf32>
    %14 = arith.addf %11, %13 : vector<8x32xf32>
    %c0_12 = arith.constant 0 : index
    %c0_13 = arith.constant 0 : index
    %15 = vector.load %arg7[%c0_12, %c0_13] : memref<8x32xf32, #tpu.memory_space<vmem>>, vector<8x32xf32>
    tpu.vector_store %arg7[%c0_12, %c0_13], %14 {strides = array<i32>} : memref<8x32xf32, #tpu.memory_space<vmem>>, vector<8x32xf32>,
    %c0_i32_14 = arith.constant 0 : i32
    %16 = arith.cmpi eq, %arg1, %c0_i32_14 : i32
    %17 = arith.extui %16 : i1 to i32
    %c0_i32_15 = arith.constant 0 : i32
    %18 = arith.cmpi ne, %17, %c0_i32_15 : i32
    scf.if %18 {
      %c0_16 = arith.constant 0 : index
      %c0_17 = arith.constant 0 : index
      %19 = vector.load %arg7[%c0_16, %c0_17] : memref<8x32xf32, #tpu.memory_space<vmem>>, vector<8x32xf32>
      %c0_18 = arith.constant 0 : index
      %c0_19 = arith.constant 0 : index
      %20 = vector.load %arg6[%c0_18, %c0_19] : memref<1x32xf32, #tpu.memory_space<vmem>>, vector<1x32xf32>
      %21 = vector.broadcast %20 : vector<1x32xf32> to vector<8x32xf32>
      %22 = arith.addf %19, %21 : vector<8x32xf32>
      %c0_20 = arith.constant 0 : index
      %c0_21 = arith.constant 0 : index
      %23 = vector.load %arg7[%c0_20, %c0_21] : memref<8x32xf32, #tpu.memory_space<vmem>>, vector<8x32xf32>
      tpu.vector_store %arg7[%c0_20, %c0_21], %22 {strides = array<i32>} : memref<8x32xf32, #tpu.memory_space<vmem>>, vector<8x32xf32>,
    } else {
    }
    return
  }
  func.func @transform_0(%arg0: i32, %arg1: i32) -> (i32, i32) {
    %c0_i32 = arith.constant 0 : i32
    %c0_i32_0 = arith.constant 0 : i32
    return %arg0, %c0_i32 : i32, i32
  }
  func.func @transform_1(%arg0: i32, %arg1: i32) -> (i32, i32) {
    %c0_i32 = arith.constant 0 : i32
    %c0_i32_0 = arith.constant 0 : i32
    return %c0_i32, %arg1 : i32, i32
  }
  func.func @transform_2(%arg0: i32, %arg1: i32) -> (i32, i32) {
    %c0_i32 = arith.constant 0 : i32
    %c0_i32_0 = arith.constant 0 : i32
    return %c0_i32, %arg1 : i32, i32
  }
  func.func @transform_3(%arg0: i32, %arg1: i32) -> (i32, i32) {
    %c0_i32 = arith.constant 0 : i32
    %c0_i32_0 = arith.constant 0 : i32
    return %arg1, %c0_i32 : i32, i32
  }
  func.func @transform_4(%arg0: i32, %arg1: i32) -> (i32, i32) {
    %c0_i32 = arith.constant 0 : i32
    %c0_i32_0 = arith.constant 0 : i32
    %c0_i32_1 = arith.constant 0 : i32
    return %c0_i32, %c0_i32_0 : i32, i32
  }
  func.func @transform_5(%arg0: i32, %arg1: i32) -> (i32, i32) {
    %c0_i32 = arith.constant 0 : i32
    %c0_i32_0 = arith.constant 0 : i32
    return %arg0, %c0_i32 : i32, i32
  }
}

</mosaic_0001>

<llo_original>
// kernel: tpu_custom_call.1
$region0: #{tpu_custom_call.1}
  #allocation0 [shape = 'u32[]', space=smem, size = 0x4, offset = 0x4, fixed_abs, tag = 'smem constant byte address 0x4 - core index']
  #allocation1 [shape = 'u32[72,128]{1,0:T(1,128)}', space=vmem, size = 0x9000, scoped, tag = 'internal scratch']
  %s0 = inlined_call_operand.vmem [shape: f32[16,32], index: 0, kind: input, shape index: {}]
  %s1 = inlined_call_operand.vmem [shape: f32[32,64], index: 1, kind: input, shape index: {}]
  %s2 = inlined_call_operand.vmem [shape: f32[1,64], index: 2, kind: input, shape index: {}]
  %s3 = inlined_call_operand.vmem [shape: f32[64,32], index: 3, kind: input, shape index: {}]
  %s4 = inlined_call_operand.vmem [shape: f32[1,32], index: 4, kind: input, shape index: {}]
  %s5 = inlined_call_operand.hbm [shape: f32[16,32], index: 5, kind: output, shape index: {}]
  %s6 = sld [smem:[#allocation0]]
  $region61: #{tpu_custom_call.1} parent=0
    _
  %s8 = ssub.s32 1, %s6
  %s9 = scalar_select 0, %s8, %s6
  $region1: #{tpu_custom_call.1} parent=0
    #allocation2 [shape = 'u8[8192]{0}', space=vmem, size = 0x2000, scoped, tag = 'output window, operand 0']
    #allocation3 [shape = 's32[2]{0}', space=sflag, size = 0x8, scoped, tag = 'scoped memory for tpu_custom_call.1']
    %10 = vsyncpa [#allocation3], 0
    %s11 = scalar_lea.sflag [#allocation3], 1
    %12 = vsyncpa %s11, 0
    loop: start=0, step=1, limit=4
    $region2: #{tpu_custom_call.1} parent=1 // loop_pre_header
      _
    $region3: #{tpu_custom_call.1} parent=1 // loop_header
      %s14 = sphi 0, %s18
      %p15 = scmp.ge.s32.totalorder %s14, 4
      %s21 = sphi 0, %s33
      %s22 = sphi 0, %s29
      %s23 = sphi 0, %s21
      %s24 = sphi 0, %s22
      %s25 = sphi 0, %s23
      %s26 = sphi 0, %s24
      %s36 = sphi 0, %s38
      %s39 = sphi 0, %s36
      %s40 = sphi 0, %s39
      %s56 = sphi 0, %s40
      %s62 = sphi 0, %s64
      %s65 = sphi 0, %s62
      %s66 = sphi 0, %s65
      %s82 = sphi 0, %s66
      %s88 = sphi 0, %s90
      %s91 = sphi 0, %s88
      %s92 = sphi 0, %s91
      %s108 = sphi 0, %s92
      %s114 = sphi 0, %s116
      %s117 = sphi 0, %s114
      %s118 = sphi 0, %s117
      %s134 = sphi 0, %s118
      %s138 = sphi 0, %s138
      %s140 = sphi 0, %s138
      %s141 = sphi 0, %s140
      %s155 = sphi 0, %s141
      %s161 = sphi 0, %s163
      %s164 = sphi 0, %s161
      %s165 = sphi 0, %s164
      %s181 = sphi 0, %s165
    $region4: #{tpu_custom_call.1} parent=1 // loop_header_branch
      %17 = sbr.rel (%p15) target = $region8
    $region5: #{tpu_custom_call.1} parent=1 // loop_body
      %s19 = ssub.s32 %s14, 1
      %s20 = ssub.s32 %s14, 2
      %s27 = sadd.s32 1, %s22
      %p28 = scmp.ge.s32.totalorder %s27, 1
      %s29 = scalar_select %p28, 0, %s27
      %s30 = sadd.s32 1, %s21
      %s31 = scalar_select %p28, %s30, %s21
      %p32 = scmp.ge.s32.totalorder %s31, 2
      %s33 = scalar_select %p32, 0, %s31
      %s34 = ssub.s32 %s21, %s33
      %p35 = scmp.eq.s32.totalorder %s34, 0
      %s37 = sadd.s32 %s36, 1
      %s38 = scalar_select %p35, %s36, %s37
      %p41 = pneg %p35
      %p42 = scmp.eq.s32.totalorder %s14, 1
      %p43 = por %p41, %p42
      %p44 = scmp.ne.s32.totalorder %s36, %s39
      %p45 = scmp.eq.s32.totalorder %s14, 0
      %p46 = por %p44, %p45
      %p47 = scmp.ne.s32.totalorder %s36, %s39
      %p48 = scmp.eq.s32.totalorder %s19, 1
      %p49 = por %p47, %p48
      %p50 = scmp.ne.s32.totalorder %s39, %s40
      %p51 = scmp.eq.s32.totalorder %s19, 0
      %p52 = por %p50, %p51
      %p53 = scmp.ne.s32.totalorder %s39, %s40
      %p54 = scmp.eq.s32.totalorder %s20, 1
      %p55 = por %p53, %p54
      %p57 = scmp.ne.s32.totalorder %s40, %s56
      %p58 = scmp.eq.s32.totalorder %s20, 0
      %p59 = por %p57, %p58
      %s60 = ssub.s32 %s22, %s29
      %p61 = scmp.eq.s32.totalorder %s60, 0
      %s63 = sadd.s32 %s62, 1
      %s64 = scalar_select %p61, %s62, %s63
      %p67 = pneg %p61
      %p68 = scmp.eq.s32.totalorder %s14, 1
      %p69 = por %p67, %p68
      %p70 = scmp.ne.s32.totalorder %s62, %s65
      %p71 = scmp.eq.s32.totalorder %s14, 0
      %p72 = por %p70, %p71
      %p73 = scmp.ne.s32.totalorder %s62, %s65
      %p74 = scmp.eq.s32.totalorder %s19, 1
      %p75 = por %p73, %p74
      %p76 = scmp.ne.s32.totalorder %s65, %s66
      %p77 = scmp.eq.s32.totalorder %s19, 0
      %p78 = por %p76, %p77
      %p79 = scmp.ne.s32.totalorder %s65, %s66
      %p80 = scmp.eq.s32.totalorder %s20, 1
      %p81 = por %p79, %p80
      %p83 = scmp.ne.s32.totalorder %s66, %s82
      %p84 = scmp.eq.s32.totalorder %s20, 0
      %p85 = por %p83, %p84
      %s86 = ssub.s32 %s22, %s29
      %p87 = scmp.eq.s32.totalorder %s86, 0
      %s89 = sadd.s32 %s88, 1
      %s90 = scalar_select %p87, %s88, %s89
      %p93 = pneg %p87
      %p94 = scmp.eq.s32.totalorder %s14, 1
      %p95 = por %p93, %p94
      %p96 = scmp.ne.s32.totalorder %s88, %s91
      %p97 = scmp.eq.s32.totalorder %s14, 0
      %p98 = por %p96, %p97
      %p99 = scmp.ne.s32.totalorder %s88, %s91
      %p100 = scmp.eq.s32.totalorder %s19, 1
      %p101 = por %p99, %p100
      %p102 = scmp.ne.s32.totalorder %s91, %s92
      %p103 = scmp.eq.s32.totalorder %s19, 0
      %p104 = por %p102, %p103
      %p105 = scmp.ne.s32.totalorder %s91, %s92
      %p106 = scmp.eq.s32.totalorder %s20, 1
      %p107 = por %p105, %p106
      %p109 = scmp.ne.s32.totalorder %s92, %s108
      %p110 = scmp.eq.s32.totalorder %s20, 0
      %p111 = por %p109, %p110
      %s112 = ssub.s32 %s22, %s29
      %p113 = scmp.eq.s32.totalorder %s112, 0
      %s115 = sadd.s32 %s114, 1
      %s116 = scalar_select %p113, %s114, %s115
      %p119 = pneg %p113
      %p120 = scmp.eq.s32.totalorder %s14, 1
      %p121 = por %p119, %p120
      %p122 = scmp.ne.s32.totalorder %s114, %s117
      %p123 = scmp.eq.s32.totalorder %s14, 0
      %p124 = por %p122, %p123
      %p125 = scmp.ne.s32.totalorder %s114, %s117
      %p126 = scmp.eq.s32.totalorder %s19, 1
      %p127 = por %p125, %p126
      %p128 = scmp.ne.s32.totalorder %s117, %s118
      %p129 = scmp.eq.s32.totalorder %s19, 0
      %p130 = por %p128, %p129
      %p131 = scmp.ne.s32.totalorder %s117, %s118
      %p132 = scmp.eq.s32.totalorder %s20, 1
      %p133 = por %p131, %p132
      %p135 = scmp.ne.s32.totalorder %s118, %s134
      %p136 = scmp.eq.s32.totalorder %s20, 0
      %p137 = por %p135, %p136
      %s139 = sadd.s32 %s138, 1
      %p142 = scmp.eq.s32.totalorder %s14, 1
      %p143 = scmp.ne.s32.totalorder %s138, %s140
      %p144 = scmp.eq.s32.totalorder %s14, 0
      %p145 = por %p143, %p144
      %p146 = scmp.ne.s32.totalorder %s138, %s140
      %p147 = scmp.eq.s32.totalorder %s19, 1
      %p148 = por %p146, %p147
      %p149 = scmp.ne.s32.totalorder %s140, %s141
      %p150 = scmp.eq.s32.totalorder %s19, 0
      %p151 = por %p149, %p150
      %p152 = scmp.ne.s32.totalorder %s140, %s141
      %p153 = scmp.eq.s32.totalorder %s20, 1
      %p154 = por %p152, %p153
      %p156 = scmp.ne.s32.totalorder %s141, %s155
      %p157 = scmp.eq.s32.totalorder %s20, 0
      %p158 = por %p156, %p157
      %s159 = ssub.s32 %s21, %s33
      %p160 = scmp.eq.s32.totalorder %s159, 0
      %s162 = sadd.s32 %s161, 1
      %s163 = scalar_select %p160, %s161, %s162
      %p166 = pneg %p160
      %p167 = scmp.eq.s32.totalorder %s14, 1
      %p168 = por %p166, %p167
      %p169 = scmp.ne.s32.totalorder %s161, %s164
      %p170 = scmp.eq.s32.totalorder %s14, 0
      %p171 = por %p169, %p170
      %p172 = scmp.ne.s32.totalorder %s161, %s164
      %p173 = scmp.eq.s32.totalorder %s19, 1
      %p174 = por %p172, %p173
      %p175 = scmp.ne.s32.totalorder %s164, %s165
      %p176 = scmp.eq.s32.totalorder %s19, 0
      %p177 = por %p175, %p176
      %p178 = scmp.ne.s32.totalorder %s164, %s165
      %p179 = scmp.eq.s32.totalorder %s20, 1
      %p180 = por %p178, %p179
      %p182 = scmp.ne.s32.totalorder %s165, %s181
      %p183 = scmp.eq.s32.totalorder %s20, 0
      %p184 = por %p182, %p183
      %p185 = scmp.le.s32.totalorder 1, %s14
      %p186 = scmp.lt.s32.totalorder %s14, 3
      %p187 = pnand %p185, %p186
      %p188 = pneg %p187
      // Predicated region
      $region9: #{tpu_custom_call.1} parent=5 // pred_check
        _
      $region10: #{tpu_custom_call.1} parent=5 // pred_check_branch
        %190 = sbr.rel (%p187) target = $region12
      $region11: #{tpu_custom_call.1} parent=5 // pred_region
        %s191 = ssub.s32 %s14, 1
        // Predicated region
        $region13: #{tpu_custom_call.1} parent=11 // pred_check
          %p192 = pneg %p78
        $region14: #{tpu_custom_call.1} parent=11 // pred_check_branch
          %194 = sbr.rel (%p192) target = $region16
        $region15: #{tpu_custom_call.1} parent=11 // pred_region
          %p195 = scmp.lt.s32.totalorder %s24, 0
          %s196 = scalar_select %p195, %s24, 0
          %s197 = smul.addr %s196, 8
          %s198 = scalar_lea.vmem %s1, %s197
        $region16: #{tpu_custom_call.1} parent=11 // pred_fallthru
          _
        // Predicated region
        $region17: #{tpu_custom_call.1} parent=11 // pred_check
          %p199 = pneg %p104
        $region18: #{tpu_custom_call.1} parent=11 // pred_check_branch
          %201 = sbr.rel (%p199) target = $region20
        $region19: #{tpu_custom_call.1} parent=11 // pred_region
          %p202 = scmp.lt.s32.totalorder %s24, 0
          %s203 = scalar_select %p202, %s24, 0
          %s204 = scalar_lea.vmem %s2, %s203
        $region20: #{tpu_custom_call.1} parent=11 // pred_fallthru
          _
        // Predicated region
        $region21: #{tpu_custom_call.1} parent=11 // pred_check
          %p205 = pneg %p130
        $region22: #{tpu_custom_call.1} parent=11 // pred_check_branch
          %207 = sbr.rel (%p205) target = $region24
        $region23: #{tpu_custom_call.1} parent=11 // pred_region
          %s208 = smul.u32 8, %s24
          %p209 = scmp.lt.s32.totalorder %s208, 7
          %s210 = scalar_select %p209, %s208, 7
          %s211 = smul.addr %s210, 8
          %s212 = scalar_lea.vmem %s3, %s211
          %s213 = smul.u32 8, %s24
        $region24: #{tpu_custom_call.1} parent=11 // pred_fallthru
          _
        // Predicated region
        $region25: #{tpu_custom_call.1} parent=11 // pred_check
          %p214 = pneg %p151
        $region26: #{tpu_custom_call.1} parent=11 // pred_check_branch
          %216 = sbr.rel (%p214) target = $region28
        $region27: #{tpu_custom_call.1} parent=11 // pred_region
          _
        $region28: #{tpu_custom_call.1} parent=11 // pred_fallthru
          _
      $region12: #{tpu_custom_call.1} parent=5 // pred_fallthru
        _
      %p217 = scmp.lt.s32.totalorder %s14, 2
      // Predicated region
      $region29: #{tpu_custom_call.1} parent=5 // pred_check
        %p218 = pneg %p217
      $region30: #{tpu_custom_call.1} parent=5 // pred_check_branch
        %220 = sbr.rel (%p218) target = $region32
      $region31: #{tpu_custom_call.1} parent=5 // pred_region
        // Predicated region
        $region33: #{tpu_custom_call.1} parent=31 // pred_check
          %p221 = pneg %p46
        $region34: #{tpu_custom_call.1} parent=31 // pred_check_branch
          %223 = sbr.rel (%p221) target = $region36
        $region35: #{tpu_custom_call.1} parent=31 // pred_region
          %p224 = scmp.lt.s32.totalorder %s21, 1
          %s225 = scalar_select %p224, %s21, 1
          %s226 = smul.addr %s225, 8
          %s227 = scalar_lea.vmem %s0, %s226
        $region36: #{tpu_custom_call.1} parent=31 // pred_fallthru
          _
      $region32: #{tpu_custom_call.1} parent=5 // pred_fallthru
        _
      %p228 = scmp.le.s32.totalorder 1, %s14
      %p229 = scmp.lt.s32.totalorder %s14, 3
      %p230 = pnand %p228, %p229
      %p231 = pneg %p230
      // Predicated region
      $region37: #{tpu_custom_call.1} parent=5 // pred_check
        _
      $region38: #{tpu_custom_call.1} parent=5 // pred_check_branch
        %233 = sbr.rel (%p230) target = $region40
      $region39: #{tpu_custom_call.1} parent=5 // pred_region
        %s234 = ssub.s32 %s14, 1
        %p235 = scmp.lt.s32.totalorder %s23, 1
        %s236 = scalar_select %p235, %s23, 1
        %s237 = smul.addr %s236, 8
        %s238 = scalar_lea.vmem %s0, %s237
        %p239 = pneg %p52
        %p240 = pneg %p49
        %p241 = scmp.lt.s32.totalorder %s24, 0
        %s242 = scalar_select %p241, %s24, 0
        %s243 = smul.addr %s242, 8
        %s244 = scalar_lea.vmem %s1, %s243
        %p245 = pneg %p78
        %p246 = pneg %p75
        %p247 = scmp.lt.s32.totalorder %s24, 0
        %s248 = scalar_select %p247, %s24, 0
        %s249 = scalar_lea.vmem %s2, %s248
        %p250 = pneg %p104
        %p251 = pneg %p101
        %s252 = smul.u32 8, %s24
        %p253 = scmp.lt.s32.totalorder %s252, 7
        %s254 = scalar_select %p253, %s252, 7
        %s255 = smul.addr %s254, 8
        %s256 = scalar_lea.vmem %s3, %s255
        %p257 = pneg %p130
        %p258 = pneg %p127
        %p259 = pneg %p151
        %p260 = pneg %p148
        %p261 = pneg %p177
        %p262 = pneg %p174
        %s263 = sand.u32 %s164, 1
        %s264 = scalar_lea.sflag [#allocation3], %s263
        %s265 = sand.u32 %s164, 1
        %s266 = smul.addr %s265, 8
        %s267 = scalar_lea.vmem [#allocation2], %s266
        %p268 = scmp.lt.s32.totalorder %s23, 1
        %s269 = scalar_select %p268, %s23, 1
        %s270 = smul.addr %s269, 8
        %s271 = scalar_lea.vmem %s0, %s270
        %p272 = scmp.lt.s32.totalorder %s24, 0
        %s273 = scalar_select %p272, %s24, 0
        %s274 = smul.addr %s273, 8
        %s275 = scalar_lea.vmem %s1, %s274
        %p276 = scmp.lt.s32.totalorder %s24, 0
        %s277 = scalar_select %p276, %s24, 0
        %s278 = scalar_lea.vmem %s2, %s277
        %s279 = smul.u32 8, %s24
        %p280 = scmp.lt.s32.totalorder %s279, 7
        %s281 = scalar_select %p280, %s279, 7
        %s282 = smul.addr %s281, 8
        %s283 = scalar_lea.vmem %s3, %s282
        %s284 = smul.u32 8, %s24
        %p285 = scmp.eq.s32.totalorder %s24, 0
        // Predicated region
        $region41: #{tpu_custom_call.1} parent=39 // pred_check
          %p286 = pneg %p285
        $region42: #{tpu_custom_call.1} parent=39 // pred_check_branch
          %288 = sbr.rel (%p286) target = $region44
        $region43: #{tpu_custom_call.1} parent=39 // pred_region
          %vm289 = vcmask 261120
          %290 = vst.msk [vmem:[%s267] sm:$0xff] %vm289, 0.0
        $region44: #{tpu_custom_call.1} parent=39 // pred_fallthru
          _
        %v291 = vld [vmem:[%s271] sm:$0xff]
        %v292 = vld [vmem:[%s275] sm:$0xff]
        %v293 = vld [vmem:[%s275 + $0x8] sm:$0xff]
        %v294 = vld [vmem:[%s275 + $0x10] sm:$0xff]
        %v295 = vld [vmem:[%s275 + $0x18] sm:$0xff]
        %v296 = vld [vmem:[%s278] sm:$0x1]
        %v298 = vperm.slane %v296, 0
        %vm300 = vcmask 261120
        %v302 = vsel %vm300, %v291, 0
        %304 = vmatpush.msra.mxu0 0.0
        %305 = vmatpush.msra.mxu0 0.0
        %306 = vmatpush.msra.mxu0 0.0
        %307 = vmatpush.msra.mxu0 0.0
        %308 = vmatpush.msra.mxu0 0.0
        %309 = vmatpush.msra.mxu0 0.0
        %310 = vmatpush.msra.mxu0 0.0
        %311 = vmatpush.msra.mxu0 0.0
        %312 = vmatpush.msra.mxu0 0.0
        %313 = vmatpush.msra.mxu0 0.0
        %314 = vmatpush.msra.mxu0 0.0
        %315 = vmatpush.msra.mxu0 0.0
        %316 = vmatpush.msra.mxu0 %v295
        %317 = vmatpush.msra.mxu0 %v294
        %318 = vmatpush.msra.mxu0 %v293
        %319 = vmatpush.msra.mxu0 %v292
        %320 = vmatmul.f32.gmra.mxu0 %v302
        %v321 = vpop.f32.mrf.mxu0
        %v322 = vadd.f32 %v298, %v321
        %323 = vdwg.mxu0
        %v324 = vmax.f32 %v322, 0.0
        %v325 = vld [vmem:[%s267] sm:$0xff]
        %v326 = vld [vmem:[%s283] sm:$0xff]
        %v327 = vld [vmem:[%s283 + $0x8] sm:$0xff]
        %v328 = vld [vmem:[%s283 + $0x10] sm:$0xff]
        %v329 = vld [vmem:[%s283 + $0x18] sm:$0xff]
        %v330 = vld [vmem:[%s283 + $0x20] sm:$0xff]
        %v331 = vld [vmem:[%s283 + $0x28] sm:$0xff]
        %v332 = vld [vmem:[%s283 + $0x30] sm:$0xff]
        %v333 = vld [vmem:[%s283 + $0x38] sm:$0xff]
        %vm334 = vcmask 523264
        %v336 = vsel %vm334, %v324, 0
        %338 = vmatpush.msra.mxu0 0.0
        %339 = vmatpush.msra.mxu0 0.0
        %340 = vmatpush.msra.mxu0 0.0
        %341 = vmatpush.msra.mxu0 0.0
        %342 = vmatpush.msra.mxu0 0.0
        %343 = vmatpush.msra.mxu0 0.0
        %344 = vmatpush.msra.mxu0 0.0
        %345 = vmatpush.msra.mxu0 0.0
        %346 = vmatpush.msra.mxu0 %v333
        %347 = vmatpush.msra.mxu0 %v332
        %348 = vmatpush.msra.mxu0 %v331
        %349 = vmatpush.msra.mxu0 %v330
        %350 = vmatpush.msra.mxu0 %v329
        %351 = vmatpush.msra.mxu0 %v328
        %352 = vmatpush.msra.mxu0 %v327
        %353 = vmatpush.msra.mxu0 %v326
        %354 = vmatmul.f32.gmra.mxu0 %v336
        %v355 = vpop.f32.mrf.mxu0
        %v356 = vadd.f32 0.0, %v355
        %357 = vdwg.mxu0
        %v358 = vadd.f32 %v325, %v356
        %359 = vst.msk [vmem:[%s267] sm:$0xff] %vm300, %v358
        // Predicated region
        $region45: #{tpu_custom_call.1} parent=39 // pred_check
          %p360 = pneg %p285
        $region46: #{tpu_custom_call.1} parent=39 // pred_check_branch
          %362 = sbr.rel (%p360) target = $region48
        $region47: #{tpu_custom_call.1} parent=39 // pred_region
          %v363 = vld [vmem:[%s267] sm:$0xff]
          %v364 = vld [vmem:[%s4] sm:$0x1]
          %v366 = vperm.slane %v364, 0
          %v368 = vadd.f32 %v363, %v366
          %369 = vst.msk [vmem:[%s267] sm:$0xff] %vm300, %v368
        $region48: #{tpu_custom_call.1} parent=39 // pred_fallthru
          _
        %s370 = sand.u32 %s164, 1
        %s371 = scalar_lea.sflag [#allocation3], %s370
        %s372 = sand.u32 %s164, 1
        %s373 = smul.addr %s372, 8
        %s374 = scalar_lea.vmem [#allocation2], %s373
        // Predicated region
        $region49: #{tpu_custom_call.1} parent=39 // pred_check
          %p375 = pneg %p174
        $region50: #{tpu_custom_call.1} parent=39 // pred_check_branch
          %377 = sbr.rel (%p375) target = $region52
        $region51: #{tpu_custom_call.1} parent=39 // pred_region
          %379 = vsyncadd %s371, 0
          %s380 = smul.addr %s23, 8
          %s381 = scalar_lea.hbm %s5, %s380
          %s383 = sshll.u32 %s374, 4
          %s384 = int_to_ptr.vmem [resolvable:$true] %s383
          %s385 = sshll.u32 %s381, 4
          %s386 = int_to_ptr.hbm [resolvable:$true] %s385
          %388 = dma.vmem_to_hbm [thread:$0]  %s384, 128, %s386, %s371
        $region52: #{tpu_custom_call.1} parent=39 // pred_fallthru
          _
      $region40: #{tpu_custom_call.1} parent=5 // pred_fallthru
        _
      %p389 = scmp.le.s32.totalorder 2, %s14
      // Predicated region
      $region53: #{tpu_custom_call.1} parent=5 // pred_check
        %p390 = pneg %p389
      $region54: #{tpu_custom_call.1} parent=5 // pred_check_branch
        %392 = sbr.rel (%p390) target = $region56
      $region55: #{tpu_custom_call.1} parent=5 // pred_region
        %s393 = ssub.s32 %s14, 2
        // Predicated region
        $region57: #{tpu_custom_call.1} parent=55 // pred_check
          %p394 = pneg %p180
        $region58: #{tpu_custom_call.1} parent=55 // pred_check_branch
          %396 = sbr.rel (%p394) target = $region60
        $region59: #{tpu_custom_call.1} parent=55 // pred_region
          %s397 = sand.u32 %s165, 1
          %s398 = scalar_lea.sflag [#allocation3], %s397
          %s399 = sand.u32 %s165, 1
          %s400 = smul.addr %s399, 8
          %s401 = scalar_lea.vmem [#allocation2], %s400
          %403 = dma.done %s398, 128
        $region60: #{tpu_custom_call.1} parent=55 // pred_fallthru
          _
      $region56: #{tpu_custom_call.1} parent=5 // pred_fallthru
        _
    $region6: #{tpu_custom_call.1} parent=1 // loop_footer
      %s18 = sadd.s32 1, %s14
    $region7: #{tpu_custom_call.1} parent=1 // loop_footer_branch
      %13 = sbr.rel target = $region3
    $region8: #{tpu_custom_call.1} parent=1 // loop_exit
      _
    %404 = vsyncpa [#allocation3], 1
    %s405 = scalar_lea.sflag [#allocation3], 1
    %406 = vsyncpa %s405, 1

</llo_original>
